<compile_context>
chip_gen: v5e
topology: v5e:2x2
jax: 0.10.0
libtpu: 0.0.40
codegen_flags: <defaults>
</compile_context>

<pallas_src>
import jax
import jax.numpy as jnp
from jax.experimental import pallas as pl
from jax.experimental.pallas import tpu as pltpu

_LANE = 128
_SUBLANE = 8


def _classifier_kernel(x_ref, w_ref, b_ref, o_ref):
    # x_ref: (TB, C, HW)   w_ref: (C, NCp)   b_ref: (1, NCp)   o_ref: (TB, NCp)
    pooled = jnp.mean(x_ref[...], axis=-1)                 # 7x7 global avg pool -> (TB, C)
    o_ref[...] = (
        jnp.dot(pooled, w_ref[...], preferred_element_type=jnp.float32)
        + b_ref[...]
    )


def prepare_classifier_params(weight, bias):
    """One-time (model-init) prep: transpose + lane-pad num_classes.

    weight: (num_classes, C) nn.Linear weight; bias: (num_classes,).
    Returns w_t: (C, NCp), b_pad: (1, NCp) with NCp = ceil(num_classes/128)*128.
    """
    nc, _ = weight.shape
    ncp = pl.cdiv(nc, _LANE) * _LANE
    w_t = jnp.pad(weight.astype(jnp.float32).T, ((0, 0), (0, ncp - nc)))
    b_pad = jnp.pad(bias.astype(jnp.float32), (0, ncp - nc)).reshape(1, ncp)
    return w_t, b_pad


def _vmem_budget_bytes():
    """~75% of physical per-core VMEM (96 MiB v5e/v6e, 48 MiB v7x)."""
    try:
        phys = int(pltpu.get_tpu_info().vmem_capacity_bytes)
    except Exception:
        phys = 64 << 20  # conservative fallback (v7x-sized)
    return (phys * 3) // 4


def _tile_vmem_bytes(tb, c, hw, ncp):
    """fp32 VMEM footprint of one grid step, using padded (sublane/lane) layouts.

    Activation and output tiles double-buffered; weight/bias also counted
    double-buffered in case Buffered(1) is unavailable (conservative).
    """
    c_p = pl.cdiv(c, _SUBLANE) * _SUBLANE
    hw_p = pl.cdiv(hw, _LANE) * _LANE
    x_bytes = 2 * tb * c_p * hw_p * 4
    o_bytes = 2 * tb * ncp * 4
    w_bytes = 2 * (c_p * ncp + _SUBLANE * ncp) * 4
    return x_bytes + o_bytes + w_bytes


def classifier_forward(x_tuple, w_t, b_pad, num_classes, block_b=None):
    """x_tuple: (x0, x1) like the PyTorch module; only x[1] is used.

    x1: (B, C, 7, 7) float32 NCHW. w_t/b_pad from prepare_classifier_params.
    """
    x1 = x_tuple[1]
    B, C, H, W = x1.shape
    assert H == 7 and W == 7, "AmoebaNet classifier expects 7x7 spatial input"
    HW = H * W
    NCp = w_t.shape[1]
    assert w_t.shape == (C, NCp) and b_pad.shape == (1, NCp)

    budget = _vmem_budget_bytes()

    if block_b is None:
        # Largest batch tile that fits the VMEM budget; prefer grid=1.
        if _tile_vmem_bytes(B, C, HW, NCp) <= budget:
            block_b = B
        else:
            start = (min(B, 256) // _SUBLANE) * _SUBLANE
            cands = [
                d for d in range(start, 0, -_SUBLANE)
                if B % d == 0 and _tile_vmem_bytes(d, C, HW, NCp) <= budget
            ]
            if not cands:
                raise ValueError("no batch tile fits the VMEM budget")
            block_b = cands[0]
    assert block_b == B or (block_b % _SUBLANE == 0 and B % block_b == 0), (
        "batch tile must be 8-aligned and divide B exactly")

    grid_b = B // block_b

    need = _tile_vmem_bytes(block_b, C, HW, NCp)
    vmem_limit = int(min(max(need * 3 // 2, 16 << 20), budget))

    # Free reshape of contiguous NCHW -> (B, C, H*W); pooling happens in-kernel.
    x3 = x1.reshape(B, C, HW)

    cost = pl.CostEstimate(
        flops=B * C * HW + 2 * B * C * NCp + B * NCp,
        transcendentals=0,
        bytes_accessed=(B * C * HW + C * NCp + NCp + B * NCp) * 4,
    )

    def _call(single_buffer_resident):
        res_kw = {}
        if single_buffer_resident and hasattr(pl, "Buffered"):
            # Constant index_map: no second VMEM buffer needed for weight/bias.
            res_kw = dict(pipeline_mode=pl.Buffered(1))
        in_specs = [
            pl.BlockSpec((block_b, C, HW), lambda i: (i, 0, 0)),   # streamed batch tiles
            pl.BlockSpec((C, NCp), lambda i: (0, 0), **res_kw),    # VMEM-resident weight
            pl.BlockSpec((1, NCp), lambda i: (0, 0), **res_kw),    # VMEM-resident bias
        ]
        return pl.pallas_call(
            _classifier_kernel,
            out_shape=jax.ShapeDtypeStruct((B, NCp), jnp.float32),
            grid=(grid_b,),
            in_specs=in_specs,
            out_specs=pl.BlockSpec((block_b, NCp), lambda i: (i, 0)),
            compiler_params=pltpu.CompilerParams(
                # Batch-parallel megacore sharding: with the unexpanded weight
                # (~C*NCp*4 bytes) per-core weight DMA duplication is negligible
                # vs activation traffic, unlike the old expanded formulation.
                dimension_semantics=("parallel",),
                vmem_limit_bytes=vmem_limit,
            ),
            cost_estimate=cost,
        )(x3, w_t, b_pad)

    try:
        out = _call(True)
    except Exception:
        # Fallback for Pallas versions without pipeline_mode / Buffered(1)
        # support on top-level pallas_call BlockSpecs.
        out = _call(False)

    return out[:, :num_classes]


if __name__ == "__main__":
    key = jax.random.PRNGKey(0)
    B, C, H, W = 16, 32, 7, 7          # channel_prev = 32
    NUM_CLASSES = 10

    k0, k1, kw, kb = jax.random.split(key, 4)
    x0 = jax.random.normal(k0, (B, C, H, W), dtype=jnp.float32)   # unused (mirrors x[0])
    x1 = jax.random.normal(k1, (B, C, H, W), dtype=jnp.float32)

    # Deterministic nn.Linear-style init: U(-1/sqrt(C), 1/sqrt(C))
    bound = 1.0 / jnp.sqrt(jnp.float32(C))
    weight = jax.random.uniform(kw, (NUM_CLASSES, C), jnp.float32, -bound, bound)
    bias = jax.random.uniform(kb, (NUM_CLASSES,), jnp.float32, -bound, bound)

    # One-time param prep (outside the hot path); weight stays UNEXPANDED.
    w_t, b_pad = prepare_classifier_params(weight, bias)

    # block_b defaults to B (fits VMEM) -> grid=1: single MXU pass, no per-step overhead.
    y = classifier_forward((x0, x1), w_t, b_pad, NUM_CLASSES)
    y = jax.block_until_ready(y)

    # Reference check (plain JAX) against the original module semantics.
    pooled_ref = jnp.mean(x1, axis=(2, 3))                      # AvgPool2d(7) on 7x7 -> (B, C)
    y_ref = pooled_ref @ weight.T + bias
    assert y.shape == (B, NUM_CLASSES)
    assert jnp.allclose(y, y_ref, atol=1e-3, rtol=1e-3), float(jnp.max(jnp.abs(y - y_ref)))

    print("KERNEL_OK")
</pallas_src>

<mosaic_0001>
module attributes {stable_mosaic.version = 11 : i64} {
  func.func @_classifier_kernel(%arg0: i32, %arg1: memref<16x32x49xf32, #tpu.memory_space<vmem>>, %arg2: memref<32x128xf32, #tpu.memory_space<vmem>>, %arg3: memref<1x128xf32, #tpu.memory_space<vmem>>, %arg4: memref<16x128xf32, #tpu.memory_space<vmem>>) attributes {dimension_semantics = [#tpu.dimension_semantics<parallel>], iteration_bounds = array<i64: 1>, scalar_prefetch = 0 : i64, scratch_operands = 0 : i64, tpu.core_type = #tpu.core_type<tc>, window_params = [{transform_indices = @transform_0, window_bounds = array<i64: 16, 32, 49>}, {pipeline_mode = #tpu.pipeline_mode<synchronous>, transform_indices = @transform_1, window_bounds = array<i64: 32, 128>}, {pipeline_mode = #tpu.pipeline_mode<synchronous>, transform_indices = @transform_2, window_bounds = array<i64: 1, 128>}, {transform_indices = @transform_3, window_bounds = array<i64: 16, 128>}]} {
    %c0 = arith.constant 0 : index
    %c0_0 = arith.constant 0 : index
    %c0_1 = arith.constant 0 : index
    %0 = vector.load %arg1[%c0, %c0_0, %c0_1] : memref<16x32x49xf32, #tpu.memory_space<vmem>>, vector<16x32x49xf32>
    %cst = arith.constant dense<0.000000e+00> : vector<16x32xf32>
    %1 = vector.multi_reduction <add>, %0, %cst [2] : vector<16x32x49xf32> to vector<16x32xf32>
    %cst_2 = arith.constant 4.900000e+01 : f32
    %2 = vector.broadcast %cst_2 : f32 to vector<16x32xf32>
    %3 = arith.divf %1, %2 : vector<16x32xf32>
    %c0_3 = arith.constant 0 : index
    %c0_4 = arith.constant 0 : index
    %4 = vector.load %arg2[%c0_3, %c0_4] : memref<32x128xf32, #tpu.memory_space<vmem>>, vector<32x128xf32>
    %cst_5 = arith.constant dense<0.000000e+00> : vector<16x128xf32>
    %5 = tpu.matmul %3, %4, %cst_5 {dimension_numbers = #tpu.dot_dimension_numbers<[1], [0], [0], [1], [0, 0, 1, 1], [], []>} : vector<16x32xf32>, vector<32x128xf32>, vector<16x128xf32> -> vector<16x128xf32>
    %c0_6 = arith.constant 0 : index
    %c0_7 = arith.constant 0 : index
    %6 = vector.load %arg3[%c0_6, %c0_7] : memref<1x128xf32, #tpu.memory_space<vmem>>, vector<1x128xf32>
    %7 = vector.broadcast %6 : vector<1x128xf32> to vector<16x128xf32>
    %8 = arith.addf %5, %7 : vector<16x128xf32>
    %c0_8 = arith.constant 0 : index
    %c0_9 = arith.constant 0 : index
    %9 = vector.load %arg4[%c0_8, %c0_9] : memref<16x128xf32, #tpu.memory_space<vmem>>, vector<16x128xf32>
    tpu.vector_store %arg4[%c0_8, %c0_9], %8 {strides = array<i32>} : memref<16x128xf32, #tpu.memory_space<vmem>>, vector<16x128xf32>,
    return
  }
  func.func @transform_0(%arg0: i32) -> (i32, i32, i32) {
    %c0_i32 = arith.constant 0 : i32
    %c0_i32_0 = arith.constant 0 : i32
    %c0_i32_1 = arith.constant 0 : i32
    return %arg0, %c0_i32, %c0_i32_0 : i32, i32, i32
  }
  func.func @transform_1(%arg0: i32) -> (i32, i32) {
    %c0_i32 = arith.constant 0 : i32
    %c0_i32_0 = arith.constant 0 : i32
    %c0_i32_1 = arith.constant 0 : i32
    return %c0_i32, %c0_i32_0 : i32, i32
  }
  func.func @transform_2(%arg0: i32) -> (i32, i32) {
    %c0_i32 = arith.constant 0 : i32
    %c0_i32_0 = arith.constant 0 : i32
    %c0_i32_1 = arith.constant 0 : i32
    return %c0_i32, %c0_i32_0 : i32, i32
  }
  func.func @transform_3(%arg0: i32) -> (i32, i32) {
    %c0_i32 = arith.constant 0 : i32
    %c0_i32_0 = arith.constant 0 : i32
    return %arg0, %c0_i32 : i32, i32
  }
}

module attributes {stable_mosaic.version = 11 : i64} {
  func.func @_classifier_kernel(%arg0: i32, %arg1: memref<16x32x49xf32, #tpu.memory_space<vmem>>, %arg2: memref<32x128xf32, #tpu.memory_space<vmem>>, %arg3: memref<1x128xf32, #tpu.memory_space<vmem>>, %arg4: memref<16x128xf32, #tpu.memory_space<vmem>>) attributes {dimension_semantics = [#tpu.dimension_semantics<parallel>], iteration_bounds = array<i64: 1>, scalar_prefetch = 0 : i64, scratch_operands = 0 : i64, tpu.core_type = #tpu.core_type<tc>, window_params = [{transform_indices = @transform_0, window_bounds = array<i64: 16, 32, 49>}, {pipeline_mode = #tpu.pipeline_mode<synchronous>, transform_indices = @transform_1, window_bounds = array<i64: 32, 128>}, {pipeline_mode = #tpu.pipeline_mode<synchronous>, transform_indices = @transform_2, window_bounds = array<i64: 1, 128>}, {transform_indices = @transform_3, window_bounds = array<i64: 16, 128>}]} {
    %c0 = arith.constant 0 : index
    %c0_0 = arith.constant 0 : index
    %c0_1 = arith.constant 0 : index
    %0 = vector.load %arg1[%c0, %c0_0, %c0_1] : memref<16x32x49xf32, #tpu.memory_space<vmem>>, vector<16x32x49xf32>
    %cst = arith.constant dense<0.000000e+00> : vector<16x32xf32>
    %1 = vector.multi_reduction <add>, %0, %cst [2] : vector<16x32x49xf32> to vector<16x32xf32>
    %cst_2 = arith.constant 4.900000e+01 : f32
    %2 = vector.broadcast %cst_2 : f32 to vector<16x32xf32>
    %3 = arith.divf %1, %2 : vector<16x32xf32>
    %c0_3 = arith.constant 0 : index
    %c0_4 = arith.constant 0 : index
    %4 = vector.load %arg2[%c0_3, %c0_4] : memref<32x128xf32, #tpu.memory_space<vmem>>, vector<32x128xf32>
    %cst_5 = arith.constant dense<0.000000e+00> : vector<16x128xf32>
    %5 = tpu.matmul %3, %4, %cst_5 {dimension_numbers = #tpu.dot_dimension_numbers<[1], [0], [0], [1], [0, 0, 1, 1], [], []>} : vector<16x32xf32>, vector<32x128xf32>, vector<16x128xf32> -> vector<16x128xf32>
    %c0_6 = arith.constant 0 : index
    %c0_7 = arith.constant 0 : index
    %6 = vector.load %arg3[%c0_6, %c0_7] : memref<1x128xf32, #tpu.memory_space<vmem>>, vector<1x128xf32>
    %7 = vector.broadcast %6 : vector<1x128xf32> to vector<16x128xf32>
    %8 = arith.addf %5, %7 : vector<16x128xf32>
    %c0_8 = arith.constant 0 : index
    %c0_9 = arith.constant 0 : index
    %9 = vector.load %arg4[%c0_8, %c0_9] : memref<16x128xf32, #tpu.memory_space<vmem>>, vector<16x128xf32>
    tpu.vector_store %arg4[%c0_8, %c0_9], %8 {strides = array<i32>} : memref<16x128xf32, #tpu.memory_space<vmem>>, vector<16x128xf32>,
    return
  }
  func.func @transform_0(%arg0: i32) -> (i32, i32, i32) {
    %c0_i32 = arith.constant 0 : i32
    %c0_i32_0 = arith.constant 0 : i32
    %c0_i32_1 = arith.constant 0 : i32
    return %arg0, %c0_i32, %c0_i32_0 : i32, i32, i32
  }
  func.func @transform_1(%arg0: i32) -> (i32, i32) {
    %c0_i32 = arith.constant 0 : i32
    %c0_i32_0 = arith.constant 0 : i32
    %c0_i32_1 = arith.constant 0 : i32
    return %c0_i32, %c0_i32_0 : i32, i32
  }
  func.func @transform_2(%arg0: i32) -> (i32, i32) {
    %c0_i32 = arith.constant 0 : i32
    %c0_i32_0 = arith.constant 0 : i32
    %c0_i32_1 = arith.constant 0 : i32
    return %c0_i32, %c0_i32_0 : i32, i32
  }
  func.func @transform_3(%arg0: i32) -> (i32, i32) {
    %c0_i32 = arith.constant 0 : i32
    %c0_i32_0 = arith.constant 0 : i32
    return %arg0, %c0_i32 : i32, i32
  }
}

</mosaic_0001>

<llo_original>
// kernel: tpu_custom_call.1
$region0: #{tpu_custom_call.1}
  #allocation0 [shape = 'u32[]', space=smem, size = 0x4, offset = 0x4, fixed_abs, tag = 'smem constant byte address 0x4 - core index']
  #allocation1 [shape = 'u32[72,128]{1,0:T(1,128)}', space=vmem, size = 0x9000, scoped, tag = 'internal scratch']
  %s0 = inlined_call_operand.hbm [shape: f32[16,32,49], index: 0, kind: input, shape index: {}]
  %s1 = inlined_call_operand.hbm [shape: f32[32,128], index: 1, kind: input, shape index: {}]
  %s2 = inlined_call_operand.vmem [shape: f32[1,128], index: 2, kind: input, shape index: {}]
  %s3 = inlined_call_operand.hbm [shape: f32[16,128], index: 3, kind: output, shape index: {}]
  %s4 = sld [smem:[#allocation0]]
  $region30: #{tpu_custom_call.1} parent=0
    _
  %s6 = ssub.s32 1, %s4
  %s7 = scalar_select 0, %s6, %s4
  $region1: #{tpu_custom_call.1} parent=0
    #allocation2 [shape = 'u8[262144]{0}', space=vmem, size = 0x40000, scoped, tag = 'input window, operand 0, single buffered']
    #allocation3 [shape = 's32[1]{0}', space=sflag, size = 0x4, scoped, tag = 'scoped memory for tpu_custom_call.1']
    #allocation4 [shape = 's32[1]{0}', space=sflag, size = 0x4, scoped, tag = 'scoped memory for tpu_custom_call.1']
    #allocation5 [shape = 'u8[16384]{0}', space=vmem, size = 0x4000, scoped, tag = 'input window, operand 1, single buffered']
    #allocation6 [shape = 's32[1]{0}', space=sflag, size = 0x4, scoped, tag = 'scoped memory for tpu_custom_call.1']
    #allocation7 [shape = 'u8[8192]{0}', space=vmem, size = 0x2000, scoped, tag = 'output window, operand 0, single buffered']
    %8 = vsyncpa [#allocation3], 0
    %9 = vsyncpa [#allocation6], 0
    %10 = vsyncpa [#allocation4], 0
    // Predicated region
    $region2: #{tpu_custom_call.1} parent=1 // pred_check
      _
    $region3: #{tpu_custom_call.1} parent=1 // pred_check_branch
      %12 = sbr.rel (0) target = $region5
    $region4: #{tpu_custom_call.1} parent=1 // pred_region
      %14 = vsyncadd [#allocation3], 0
      %s15 = sshll.u32 %s0, 4
      %s16 = int_to_ptr.hbm [resolvable:$true] %s15
      %s17 = sshll.u32 [#allocation2], 4
      %s18 = int_to_ptr.vmem [resolvable:$true] %s17
      %23 = dma.hbm_to_vmem [thread:$0]  %s16, 8192, %s18, [#allocation3], 128, 128, 8
    $region5: #{tpu_custom_call.1} parent=1 // pred_fallthru
      _
    // Predicated region
    $region6: #{tpu_custom_call.1} parent=1 // pred_check
      _
    $region7: #{tpu_custom_call.1} parent=1 // pred_check_branch
      %25 = sbr.rel (0) target = $region9
    $region8: #{tpu_custom_call.1} parent=1 // pred_region
      %27 = vsyncadd [#allocation6], 0
      %s28 = sshll.u32 %s1, 4
      %s29 = int_to_ptr.hbm [resolvable:$true] %s28
      %s30 = sshll.u32 [#allocation5], 4
      %s31 = int_to_ptr.vmem [resolvable:$true] %s30
      %36 = dma.hbm_to_vmem [thread:$0]  %s29, 512, %s31, [#allocation6], 128, 128, 8
    $region9: #{tpu_custom_call.1} parent=1 // pred_fallthru
      _
    // Predicated region
    $region10: #{tpu_custom_call.1} parent=1 // pred_check
      _
    $region11: #{tpu_custom_call.1} parent=1 // pred_check_branch
      %38 = sbr.rel (0) target = $region13
    $region12: #{tpu_custom_call.1} parent=1 // pred_region
      _
    $region13: #{tpu_custom_call.1} parent=1 // pred_fallthru
      _
    // Predicated region
    $region14: #{tpu_custom_call.1} parent=1 // pred_check
      _
    $region15: #{tpu_custom_call.1} parent=1 // pred_check_branch
      %40 = sbr.rel (0) target = $region17
    $region16: #{tpu_custom_call.1} parent=1 // pred_region
      %42 = dma.done [#allocation3], 8192
    $region17: #{tpu_custom_call.1} parent=1 // pred_fallthru
      _
    // Predicated region
    $region18: #{tpu_custom_call.1} parent=1 // pred_check
      _
    $region19: #{tpu_custom_call.1} parent=1 // pred_check_branch
      %44 = sbr.rel (0) target = $region21
    $region20: #{tpu_custom_call.1} parent=1 // pred_region
      %46 = dma.done [#allocation6], 512
    $region21: #{tpu_custom_call.1} parent=1 // pred_fallthru
      _
    %v47 = vld [vmem:[#allocation2] sm:$0xff]
    %v48 = vld [vmem:[#allocation2 + $0x8] sm:$0xff]
    %v49 = vld [vmem:[#allocation2 + $0x10] sm:$0xff]
    %v50 = vld [vmem:[#allocation2 + $0x18] sm:$0xff]
    %v51 = vld [vmem:[#allocation2 + $0x20] sm:$0xff]
    %v52 = vld [vmem:[#allocation2 + $0x28] sm:$0xff]
    %v53 = vld [vmem:[#allocation2 + $0x30] sm:$0xff]
    %v54 = vld [vmem:[#allocation2 + $0x38] sm:$0xff]
    %v55 = vld [vmem:[#allocation2 + $0x40] sm:$0xff]
    %v56 = vld [vmem:[#allocation2 + $0x48] sm:$0xff]
    %v57 = vld [vmem:[#allocation2 + $0x50] sm:$0xff]
    %v58 = vld [vmem:[#allocation2 + $0x58] sm:$0xff]
    %v59 = vld [vmem:[#allocation2 + $0x60] sm:$0xff]
    %v60 = vld [vmem:[#allocation2 + $0x68] sm:$0xff]
    %v61 = vld [vmem:[#allocation2 + $0x70] sm:$0xff]
    %v62 = vld [vmem:[#allocation2 + $0x78] sm:$0xff]
    %v63 = vld [vmem:[#allocation2 + $0x80] sm:$0xff]
    %v64 = vld [vmem:[#allocation2 + $0x88] sm:$0xff]
    %v65 = vld [vmem:[#allocation2 + $0x90] sm:$0xff]
    %v66 = vld [vmem:[#allocation2 + $0x98] sm:$0xff]
    %v67 = vld [vmem:[#allocation2 + $0xa0] sm:$0xff]
    %v68 = vld [vmem:[#allocation2 + $0xa8] sm:$0xff]
    %v69 = vld [vmem:[#allocation2 + $0xb0] sm:$0xff]
    %v70 = vld [vmem:[#allocation2 + $0xb8] sm:$0xff]
    %v71 = vld [vmem:[#allocation2 + $0xc0] sm:$0xff]
    %v72 = vld [vmem:[#allocation2 + $0xc8] sm:$0xff]
    %v73 = vld [vmem:[#allocation2 + $0xd0] sm:$0xff]
    %v74 = vld [vmem:[#allocation2 + $0xd8] sm:$0xff]
    %v75 = vld [vmem:[#allocation2 + $0xe0] sm:$0xff]
    %v76 = vld [vmem:[#allocation2 + $0xe8] sm:$0xff]
    %v77 = vld [vmem:[#allocation2 + $0xf0] sm:$0xff]
    %v78 = vld [vmem:[#allocation2 + $0xf8] sm:$0xff]
    %v79 = vld [vmem:[#allocation2 + $0x100] sm:$0xff]
    %v80 = vld [vmem:[#allocation2 + $0x108] sm:$0xff]
    %v81 = vld [vmem:[#allocation2 + $0x110] sm:$0xff]
    %v82 = vld [vmem:[#allocation2 + $0x118] sm:$0xff]
    %v83 = vld [vmem:[#allocation2 + $0x120] sm:$0xff]
    %v84 = vld [vmem:[#allocation2 + $0x128] sm:$0xff]
    %v85 = vld [vmem:[#allocation2 + $0x130] sm:$0xff]
    %v86 = vld [vmem:[#allocation2 + $0x138] sm:$0xff]
    %v87 = vld [vmem:[#allocation2 + $0x140] sm:$0xff]
    %v88 = vld [vmem:[#allocation2 + $0x148] sm:$0xff]
    %v89 = vld [vmem:[#allocation2 + $0x150] sm:$0xff]
    %v90 = vld [vmem:[#allocation2 + $0x158] sm:$0xff]
    %v91 = vld [vmem:[#allocation2 + $0x160] sm:$0xff]
    %v92 = vld [vmem:[#allocation2 + $0x168] sm:$0xff]
    %v93 = vld [vmem:[#allocation2 + $0x170] sm:$0xff]
    %v94 = vld [vmem:[#allocation2 + $0x178] sm:$0xff]
    %v95 = vld [vmem:[#allocation2 + $0x180] sm:$0xff]
    %v96 = vld [vmem:[#allocation2 + $0x188] sm:$0xff]
    %v97 = vld [vmem:[#allocation2 + $0x190] sm:$0xff]
    %v98 = vld [vmem:[#allocation2 + $0x198] sm:$0xff]
    %v99 = vld [vmem:[#allocation2 + $0x1a0] sm:$0xff]
    %v100 = vld [vmem:[#allocation2 + $0x1a8] sm:$0xff]
    %v101 = vld [vmem:[#allocation2 + $0x1b0] sm:$0xff]
    %v102 = vld [vmem:[#allocation2 + $0x1b8] sm:$0xff]
    %v103 = vld [vmem:[#allocation2 + $0x1c0] sm:$0xff]
    %v104 = vld [vmem:[#allocation2 + $0x1c8] sm:$0xff]
    %v105 = vld [vmem:[#allocation2 + $0x1d0] sm:$0xff]
    %v106 = vld [vmem:[#allocation2 + $0x1d8] sm:$0xff]
    %v107 = vld [vmem:[#allocation2 + $0x1e0] sm:$0xff]
    %v108 = vld [vmem:[#allocation2 + $0x1e8] sm:$0xff]
    %v109 = vld [vmem:[#allocation2 + $0x1f0] sm:$0xff]
    %v110 = vld [vmem:[#allocation2 + $0x1f8] sm:$0xff]
    %vm111 = vcmask 400384
    %v112 = vsel %vm111, %v47, 0.0
    %113 = vadd.xlane.f32.xlu0 %v112
    %v114 = vpop.xlane.xlu0 %113
    %v115 = vsel %vm111, %v48, 0.0
    %116 = vadd.xlane.f32.xlu0 %v115
    %v117 = vpop.xlane.xlu0 %116
    %v118 = vsel %vm111, %v49, 0.0
    %119 = vadd.xlane.f32.xlu0 %v118
    %v120 = vpop.xlane.xlu0 %119
    %v121 = vsel %vm111, %v50, 0.0
    %122 = vadd.xlane.f32.xlu0 %v121
    %v123 = vpop.xlane.xlu0 %122
    %v124 = vsel %vm111, %v51, 0.0
    %125 = vadd.xlane.f32.xlu0 %v124
    %v126 = vpop.xlane.xlu0 %125
    %v127 = vsel %vm111, %v52, 0.0
    %128 = vadd.xlane.f32.xlu0 %v127
    %v129 = vpop.xlane.xlu0 %128
    %v130 = vsel %vm111, %v53, 0.0
    %131 = vadd.xlane.f32.xlu0 %v130
    %v132 = vpop.xlane.xlu0 %131
    %v133 = vsel %vm111, %v54, 0.0
    %134 = vadd.xlane.f32.xlu0 %v133
    %v135 = vpop.xlane.xlu0 %134
    %v136 = vsel %vm111, %v55, 0.0
    %137 = vadd.xlane.f32.xlu0 %v136
    %v138 = vpop.xlane.xlu0 %137
    %v139 = vsel %vm111, %v56, 0.0
    %140 = vadd.xlane.f32.xlu0 %v139
    %v141 = vpop.xlane.xlu0 %140
    %v142 = vsel %vm111, %v57, 0.0
    %143 = vadd.xlane.f32.xlu0 %v142
    %v144 = vpop.xlane.xlu0 %143
    %v145 = vsel %vm111, %v58, 0.0
    %146 = vadd.xlane.f32.xlu0 %v145
    %v147 = vpop.xlane.xlu0 %146
    %v148 = vsel %vm111, %v59, 0.0
    %149 = vadd.xlane.f32.xlu0 %v148
    %v150 = vpop.xlane.xlu0 %149
    %v151 = vsel %vm111, %v60, 0.0
    %152 = vadd.xlane.f32.xlu0 %v151
    %v153 = vpop.xlane.xlu0 %152
    %v154 = vsel %vm111, %v61, 0.0
    %155 = vadd.xlane.f32.xlu0 %v154
    %v156 = vpop.xlane.xlu0 %155
    %v157 = vsel %vm111, %v62, 0.0
    %158 = vadd.xlane.f32.xlu0 %v157
    %v159 = vpop.xlane.xlu0 %158
    %v160 = vsel %vm111, %v63, 0.0
    %161 = vadd.xlane.f32.xlu0 %v160
    %v162 = vpop.xlane.xlu0 %161
    %v163 = vsel %vm111, %v64, 0.0
    %164 = vadd.xlane.f32.xlu0 %v163
    %v165 = vpop.xlane.xlu0 %164
    %v166 = vsel %vm111, %v65, 0.0
    %167 = vadd.xlane.f32.xlu0 %v166
    %v168 = vpop.xlane.xlu0 %167
    %v169 = vsel %vm111, %v66, 0.0
    %170 = vadd.xlane.f32.xlu0 %v169
    %v171 = vpop.xlane.xlu0 %170
    %v172 = vsel %vm111, %v67, 0.0
    %173 = vadd.xlane.f32.xlu0 %v172
    %v174 = vpop.xlane.xlu0 %173
    %v175 = vsel %vm111, %v68, 0.0
    %176 = vadd.xlane.f32.xlu0 %v175
    %v177 = vpop.xlane.xlu0 %176
    %v178 = vsel %vm111, %v69, 0.0
    %179 = vadd.xlane.f32.xlu0 %v178
    %v180 = vpop.xlane.xlu0 %179
    %v181 = vsel %vm111, %v70, 0.0
    %182 = vadd.xlane.f32.xlu0 %v181
    %v183 = vpop.xlane.xlu0 %182
    %v184 = vsel %vm111, %v71, 0.0
    %185 = vadd.xlane.f32.xlu0 %v184
    %v186 = vpop.xlane.xlu0 %185
    %v187 = vsel %vm111, %v72, 0.0
    %188 = vadd.xlane.f32.xlu0 %v187
    %v189 = vpop.xlane.xlu0 %188
    %v190 = vsel %vm111, %v73, 0.0
    %191 = vadd.xlane.f32.xlu0 %v190
    %v192 = vpop.xlane.xlu0 %191
    %v193 = vsel %vm111, %v74, 0.0
    %194 = vadd.xlane.f32.xlu0 %v193
    %v195 = vpop.xlane.xlu0 %194
    %v196 = vsel %vm111, %v75, 0.0
    %197 = vadd.xlane.f32.xlu0 %v196
    %v198 = vpop.xlane.xlu0 %197
    %v199 = vsel %vm111, %v76, 0.0
    %200 = vadd.xlane.f32.xlu0 %v199
    %v201 = vpop.xlane.xlu0 %200
    %v202 = vsel %vm111, %v77, 0.0
    %203 = vadd.xlane.f32.xlu0 %v202
    %v204 = vpop.xlane.xlu0 %203
    %v205 = vsel %vm111, %v78, 0.0
    %206 = vadd.xlane.f32.xlu0 %v205
    %v207 = vpop.xlane.xlu0 %206
    %v208 = vsel %vm111, %v79, 0.0
    %209 = vadd.xlane.f32.xlu0 %v208
    %v210 = vpop.xlane.xlu0 %209
    %v211 = vsel %vm111, %v80, 0.0
    %212 = vadd.xlane.f32.xlu0 %v211
    %v213 = vpop.xlane.xlu0 %212
    %v214 = vsel %vm111, %v81, 0.0
    %215 = vadd.xlane.f32.xlu0 %v214
    %v216 = vpop.xlane.xlu0 %215
    %v217 = vsel %vm111, %v82, 0.0
    %218 = vadd.xlane.f32.xlu0 %v217
    %v219 = vpop.xlane.xlu0 %218
    %v220 = vsel %vm111, %v83, 0.0
    %221 = vadd.xlane.f32.xlu0 %v220
    %v222 = vpop.xlane.xlu0 %221
    %v223 = vsel %vm111, %v84, 0.0
    %224 = vadd.xlane.f32.xlu0 %v223
    %v225 = vpop.xlane.xlu0 %224
    %v226 = vsel %vm111, %v85, 0.0
    %227 = vadd.xlane.f32.xlu0 %v226
    %v228 = vpop.xlane.xlu0 %227
    %v229 = vsel %vm111, %v86, 0.0
    %230 = vadd.xlane.f32.xlu0 %v229
    %v231 = vpop.xlane.xlu0 %230
    %v232 = vsel %vm111, %v87, 0.0
    %233 = vadd.xlane.f32.xlu0 %v232
    %v234 = vpop.xlane.xlu0 %233
    %v235 = vsel %vm111, %v88, 0.0
    %236 = vadd.xlane.f32.xlu0 %v235
    %v237 = vpop.xlane.xlu0 %236
    %v238 = vsel %vm111, %v89, 0.0
    %239 = vadd.xlane.f32.xlu0 %v238
    %v240 = vpop.xlane.xlu0 %239
    %v241 = vsel %vm111, %v90, 0.0
    %242 = vadd.xlane.f32.xlu0 %v241
    %v243 = vpop.xlane.xlu0 %242
    %v244 = vsel %vm111, %v91, 0.0
    %245 = vadd.xlane.f32.xlu0 %v244
    %v246 = vpop.xlane.xlu0 %245
    %v247 = vsel %vm111, %v92, 0.0
    %248 = vadd.xlane.f32.xlu0 %v247
    %v249 = vpop.xlane.xlu0 %248
    %v250 = vsel %vm111, %v93, 0.0
    %251 = vadd.xlane.f32.xlu0 %v250
    %v252 = vpop.xlane.xlu0 %251
    %v253 = vsel %vm111, %v94, 0.0
    %254 = vadd.xlane.f32.xlu0 %v253
    %v255 = vpop.xlane.xlu0 %254
    %v256 = vsel %vm111, %v95, 0.0
    %257 = vadd.xlane.f32.xlu0 %v256
    %v258 = vpop.xlane.xlu0 %257
    %v259 = vsel %vm111, %v96, 0.0
    %260 = vadd.xlane.f32.xlu0 %v259
    %v261 = vpop.xlane.xlu0 %260
    %v262 = vsel %vm111, %v97, 0.0
    %263 = vadd.xlane.f32.xlu0 %v262
    %v264 = vpop.xlane.xlu0 %263
    %v265 = vsel %vm111, %v98, 0.0
    %266 = vadd.xlane.f32.xlu0 %v265
    %v267 = vpop.xlane.xlu0 %266
    %v268 = vsel %vm111, %v99, 0.0
    %269 = vadd.xlane.f32.xlu0 %v268
    %v270 = vpop.xlane.xlu0 %269
    %v271 = vsel %vm111, %v100, 0.0
    %272 = vadd.xlane.f32.xlu0 %v271
    %v273 = vpop.xlane.xlu0 %272
    %v274 = vsel %vm111, %v101, 0.0
    %275 = vadd.xlane.f32.xlu0 %v274
    %v276 = vpop.xlane.xlu0 %275
    %v277 = vsel %vm111, %v102, 0.0
    %278 = vadd.xlane.f32.xlu0 %v277
    %v279 = vpop.xlane.xlu0 %278
    %v280 = vsel %vm111, %v103, 0.0
    %281 = vadd.xlane.f32.xlu0 %v280
    %v282 = vpop.xlane.xlu0 %281
    %v283 = vsel %vm111, %v104, 0.0
    %284 = vadd.xlane.f32.xlu0 %v283
    %v285 = vpop.xlane.xlu0 %284
    %v286 = vsel %vm111, %v105, 0.0
    %287 = vadd.xlane.f32.xlu0 %v286
    %v288 = vpop.xlane.xlu0 %287
    %v289 = vsel %vm111, %v106, 0.0
    %290 = vadd.xlane.f32.xlu0 %v289
    %v291 = vpop.xlane.xlu0 %290
    %v292 = vsel %vm111, %v107, 0.0
    %293 = vadd.xlane.f32.xlu0 %v292
    %v294 = vpop.xlane.xlu0 %293
    %v295 = vsel %vm111, %v108, 0.0
    %296 = vadd.xlane.f32.xlu0 %v295
    %v297 = vpop.xlane.xlu0 %296
    %v298 = vsel %vm111, %v109, 0.0
    %299 = vadd.xlane.f32.xlu0 %v298
    %v300 = vpop.xlane.xlu0 %299
    %v301 = vsel %vm111, %v110, 0.0
    %302 = vadd.xlane.f32.xlu0 %v301
    %v303 = vpop.xlane.xlu0 %302
    %v304 = vrcp.pop 49.0
    %v305 = vmul.f32 49.0, %v304
    %v306 = vsub.f32 1.0, %v305
    %v307 = vmul.f32 %v304, %v306
    %v308 = vadd.f32 %v304, %v307
    %vm309 = vweird.f32 %v304
    %v310 = vsel %vm309, %v304, %v308
    %v311 = vmul.f32 %v114, %v310
    %v312 = vmul.f32 %v117, %v310
    %v313 = vmul.f32 %v120, %v310
    %v314 = vmul.f32 %v123, %v310
    %v315 = vmul.f32 %v126, %v310
    %v316 = vmul.f32 %v129, %v310
    %v317 = vmul.f32 %v132, %v310
    %v318 = vmul.f32 %v135, %v310
    %v319 = vmul.f32 %v138, %v310
    %v320 = vmul.f32 %v141, %v310
    %v321 = vmul.f32 %v144, %v310
    %v322 = vmul.f32 %v147, %v310
    %v323 = vmul.f32 %v150, %v310
    %v324 = vmul.f32 %v153, %v310
    %v325 = vmul.f32 %v156, %v310
    %v326 = vmul.f32 %v159, %v310
    %v327 = vmul.f32 %v162, %v310
    %v328 = vmul.f32 %v165, %v310
    %v329 = vmul.f32 %v168, %v310
    %v330 = vmul.f32 %v171, %v310
    %v331 = vmul.f32 %v174, %v310
    %v332 = vmul.f32 %v177, %v310
    %v333 = vmul.f32 %v180, %v310
    %v334 = vmul.f32 %v183, %v310
    %v335 = vmul.f32 %v186, %v310
    %v336 = vmul.f32 %v189, %v310
    %v337 = vmul.f32 %v192, %v310
    %v338 = vmul.f32 %v195, %v310
    %v339 = vmul.f32 %v198, %v310
    %v340 = vmul.f32 %v201, %v310
    %v341 = vmul.f32 %v204, %v310
    %v342 = vmul.f32 %v207, %v310
    %v343 = vmul.f32 %v210, %v310
    %v344 = vmul.f32 %v213, %v310
    %v345 = vmul.f32 %v216, %v310
    %v346 = vmul.f32 %v219, %v310
    %v347 = vmul.f32 %v222, %v310
    %v348 = vmul.f32 %v225, %v310
    %v349 = vmul.f32 %v228, %v310
    %v350 = vmul.f32 %v231, %v310
    %v351 = vmul.f32 %v234, %v310
    %v352 = vmul.f32 %v237, %v310
    %v353 = vmul.f32 %v240, %v310
    %v354 = vmul.f32 %v243, %v310
    %v355 = vmul.f32 %v246, %v310
    %v356 = vmul.f32 %v249, %v310
    %v357 = vmul.f32 %v252, %v310
    %v358 = vmul.f32 %v255, %v310
    %v359 = vmul.f32 %v258, %v310
    %v360 = vmul.f32 %v261, %v310
    %v361 = vmul.f32 %v264, %v310
    %v362 = vmul.f32 %v267, %v310
    %v363 = vmul.f32 %v270, %v310
    %v364 = vmul.f32 %v273, %v310
    %v365 = vmul.f32 %v276, %v310
    %v366 = vmul.f32 %v279, %v310
    %v367 = vmul.f32 %v282, %v310
    %v368 = vmul.f32 %v285, %v310
    %v369 = vmul.f32 %v288, %v310
    %v370 = vmul.f32 %v291, %v310
    %v371 = vmul.f32 %v294, %v310
    %v372 = vmul.f32 %v297, %v310
    %v373 = vmul.f32 %v300, %v310
    %v374 = vmul.f32 %v303, %v310
    %v375 = vld [vmem:[#allocation5] sm:$0xff]
    %v376 = vld [vmem:[#allocation5 + $0x8] sm:$0xff]
    %v377 = vld [vmem:[#allocation5 + $0x10] sm:$0xff]
    %v378 = vld [vmem:[#allocation5 + $0x18] sm:$0xff]
    %v379 = vld [vmem:[%s2] sm:$0x1]
    %v381 = vperm.slane %v379, 0
    %v447 = vlaneseq
    %v448 = vand.u32 %v447, 127
    %v449 = vperm.slane %v311, %v448
    %v450 = vadd.s32 %v448, 4294967288
    %v451 = vperm.slane %v312, %v450
    %vm452 = vcmask 130112
    %v453 = vsel %vm452, %v451, %v449
    %v454 = vadd.s32 %v448, 4294967280
    %v455 = vperm.slane %v313, %v454
    %vm456 = vcmask 195712
    %v457 = vsel %vm456, %v455, %v453
    %v458 = vadd.s32 %v448, 4294967272
    %v459 = vperm.slane %v314, %v458
    %vm460 = vcmask 261312
    %v461 = vsel %vm460, %v459, %v457
    %v462 = vperm.slane %v315, %v448
    %v463 = vperm.slane %v316, %v450
    %v464 = vsel %vm452, %v463, %v462
    %v465 = vperm.slane %v317, %v454
    %v466 = vsel %vm456, %v465, %v464
    %v467 = vperm.slane %v318, %v458
    %v468 = vsel %vm460, %v467, %v466
    %v469 = vperm.slane %v319, %v448
    %v470 = vperm.slane %v320, %v450
    %v471 = vsel %vm452, %v470, %v469
    %v472 = vperm.slane %v321, %v454
    %v473 = vsel %vm456, %v472, %v471
    %v474 = vperm.slane %v322, %v458
    %v475 = vsel %vm460, %v474, %v473
    %v476 = vperm.slane %v323, %v448
    %v477 = vperm.slane %v324, %v450
    %v478 = vsel %vm452, %v477, %v476
    %v479 = vperm.slane %v325, %v454
    %v480 = vsel %vm456, %v479, %v478
    %v481 = vperm.slane %v326, %v458
    %v482 = vsel %vm460, %v481, %v480
    %v483 = vperm.slane %v327, %v448
    %v484 = vperm.slane %v328, %v450
    %v485 = vsel %vm452, %v484, %v483
    %v486 = vperm.slane %v329, %v454
    %v487 = vsel %vm456, %v486, %v485
    %v488 = vperm.slane %v330, %v458
    %v489 = vsel %vm460, %v488, %v487
    %v490 = vperm.slane %v331, %v448
    %v491 = vperm.slane %v332, %v450
    %v492 = vsel %vm452, %v491, %v490
    %v493 = vperm.slane %v333, %v454
    %v494 = vsel %vm456, %v493, %v492
    %v495 = vperm.slane %v334, %v458
    %v496 = vsel %vm460, %v495, %v494
    %v497 = vperm.slane %v335, %v448
    %v498 = vperm.slane %v336, %v450
    %v499 = vsel %vm452, %v498, %v497
    %v500 = vperm.slane %v337, %v454
    %v501 = vsel %vm456, %v500, %v499
    %v502 = vperm.slane %v338, %v458
    %v503 = vsel %vm460, %v502, %v501
    %v504 = vperm.slane %v339, %v448
    %v505 = vperm.slane %v340, %v450
    %v506 = vsel %vm452, %v505, %v504
    %v507 = vperm.slane %v341, %v454
    %v508 = vsel %vm456, %v507, %v506
    %v509 = vperm.slane %v342, %v458
    %v510 = vsel %vm460, %v509, %v508
    %v511 = vperm.slane %v343, %v448
    %v512 = vperm.slane %v344, %v450
    %v513 = vsel %vm452, %v512, %v511
    %v514 = vperm.slane %v345, %v454
    %v515 = vsel %vm456, %v514, %v513
    %v516 = vperm.slane %v346, %v458
    %v517 = vsel %vm460, %v516, %v515
    %v518 = vperm.slane %v347, %v448
    %v519 = vperm.slane %v348, %v450
    %v520 = vsel %vm452, %v519, %v518
    %v521 = vperm.slane %v349, %v454
    %v522 = vsel %vm456, %v521, %v520
    %v523 = vperm.slane %v350, %v458
    %v524 = vsel %vm460, %v523, %v522
    %v525 = vperm.slane %v351, %v448
    %v526 = vperm.slane %v352, %v450
    %v527 = vsel %vm452, %v526, %v525
    %v528 = vperm.slane %v353, %v454
    %v529 = vsel %vm456, %v528, %v527
    %v530 = vperm.slane %v354, %v458
    %v531 = vsel %vm460, %v530, %v529
    %v532 = vperm.slane %v355, %v448
    %v533 = vperm.slane %v356, %v450
    %v534 = vsel %vm452, %v533, %v532
    %v535 = vperm.slane %v357, %v454
    %v536 = vsel %vm456, %v535, %v534
    %v537 = vperm.slane %v358, %v458
    %v538 = vsel %vm460, %v537, %v536
    %v539 = vperm.slane %v359, %v448
    %v540 = vperm.slane %v360, %v450
    %v541 = vsel %vm452, %v540, %v539
    %v542 = vperm.slane %v361, %v454
    %v543 = vsel %vm456, %v542, %v541
    %v544 = vperm.slane %v362, %v458
    %v545 = vsel %vm460, %v544, %v543
    %v546 = vperm.slane %v363, %v448
    %v547 = vperm.slane %v364, %v450
    %v548 = vsel %vm452, %v547, %v546
    %v549 = vperm.slane %v365, %v454
    %v550 = vsel %vm456, %v549, %v548
    %v551 = vperm.slane %v366, %v458
    %v552 = vsel %vm460, %v551, %v550
    %v553 = vperm.slane %v367, %v448
    %v554 = vperm.slane %v368, %v450
    %v555 = vsel %vm452, %v554, %v553
    %v556 = vperm.slane %v369, %v454
    %v557 = vsel %vm456, %v556, %v555
    %v558 = vperm.slane %v370, %v458
    %v559 = vsel %vm460, %v558, %v557
    %v560 = vperm.slane %v371, %v448
    %v561 = vperm.slane %v372, %v450
    %v562 = vsel %vm452, %v561, %v560
    %v563 = vperm.slane %v373, %v454
    %v564 = vsel %vm456, %v563, %v562
    %v565 = vperm.slane %v374, %v458
    %v566 = vsel %vm460, %v565, %v564
    %vm567 = vcmask 1041409
    %v568 = vsel %vm567, %v468, %v461
    %vm569 = vcmask 1042434
    %v570 = vsel %vm569, %v475, %v568
    %vm571 = vcmask 1043459
    %v572 = vsel %vm571, %v482, %v570
    %vm573 = vcmask 1044484
    %v574 = vsel %vm573, %v489, %v572
    %vm575 = vcmask 1045509
    %v576 = vsel %vm575, %v496, %v574
    %vm577 = vcmask 1046534
    %v578 = vsel %vm577, %v503, %v576
    %vm579 = vcmask 1047559
    %v580 = vsel %vm579, %v510, %v578
    %v581 = vsel %vm567, %v524, %v517
    %v582 = vsel %vm569, %v531, %v581
    %v583 = vsel %vm571, %v538, %v582
    %v584 = vsel %vm573, %v545, %v583
    %v585 = vsel %vm575, %v552, %v584
    %v586 = vsel %vm577, %v559, %v585
    %v587 = vsel %vm579, %v566, %v586
    %vm588 = vcmask 261120
    %v589 = vsel %vm588, %v580, 0
    %v591 = vsel %vm588, %v587, 0
    %593 = vmatpush.msra.mxu0 0.0
    %594 = vmatpush.msra.mxu0 0.0
    %595 = vmatpush.msra.mxu0 0.0
    %596 = vmatpush.msra.mxu0 0.0
    %597 = vmatpush.msra.mxu0 0.0
    %598 = vmatpush.msra.mxu0 0.0
    %599 = vmatpush.msra.mxu0 0.0
    %600 = vmatpush.msra.mxu0 0.0
    %601 = vmatpush.msra.mxu0 0.0
    %602 = vmatpush.msra.mxu0 0.0
    %603 = vmatpush.msra.mxu0 0.0
    %604 = vmatpush.msra.mxu0 0.0
    %605 = vmatpush.msra.mxu0 %v378
    %606 = vmatpush.msra.mxu0 %v377
    %607 = vmatpush.msra.mxu0 %v376
    %608 = vmatpush.msra.mxu0 %v375
    %609 = vmatmul.f32.gmra.mxu0 %v589
    %v610 = vpop.f32.mrf.mxu0
    %v611 = vadd.f32 %v381, %v610
    %612 = vmatmul.f32.gmra.mxu0 %v591
    %v613 = vpop.f32.mrf.mxu0
    %v614 = vadd.f32 %v381, %v613
    %615 = vdwg.mxu0
    %616 = vst [vmem:[#allocation7] sm:$0xff] %v611
    %617 = vst [vmem:[#allocation7 + $0x8] sm:$0xff] %v614
    // Predicated region
    $region22: #{tpu_custom_call.1} parent=1 // pred_check
      _
    $region23: #{tpu_custom_call.1} parent=1 // pred_check_branch
      %619 = sbr.rel (0) target = $region25
    $region24: #{tpu_custom_call.1} parent=1 // pred_region
      %621 = vsyncadd [#allocation4], 0
      %s622 = sshll.u32 [#allocation7], 4
      %s623 = int_to_ptr.vmem [resolvable:$true] %s622
      %s624 = sshll.u32 %s3, 4
      %s625 = int_to_ptr.hbm [resolvable:$true] %s624
      %630 = dma.vmem_to_hbm [thread:$0]  %s623, 256, %s625, [#allocation4], 128, 128, 8
    $region25: #{tpu_custom_call.1} parent=1 // pred_fallthru
      _
    // Predicated region
    $region26: #{tpu_custom_call.1} parent=1 // pred_check
      _
    $region27: #{tpu_custom_call.1} parent=1 // pred_check_branch
      %632 = sbr.rel (0) target = $region29
    $region28: #{tpu_custom_call.1} parent=1 // pred_region
      %634 = dma.done [#allocation4], 256
    $region29: #{tpu_custom_call.1} parent=1 // pred_fallthru
      _
    %635 = vsyncpa [#allocation3], 1
    %636 = vsyncpa [#allocation6], 1
    %637 = vsyncpa [#allocation4], 1

// kernel: tpu_custom_call.1
$region0: #{tpu_custom_call.1}
  #allocation0 [shape = 'u32[]', space=smem, size = 0x4, offset = 0x4, fixed_abs, tag = 'smem constant byte address 0x4 - core index']
  #allocation1 [shape = 'u32[72,128]{1,0:T(1,128)}', space=vmem, size = 0x9000, scoped, tag = 'internal scratch']
  %s0 = inlined_call_operand.hbm [shape: f32[16,32,49], index: 0, kind: input, shape index: {}]
  %s1 = inlined_call_operand.hbm [shape: f32[32,128], index: 1, kind: input, shape index: {}]
  %s2 = inlined_call_operand.vmem [shape: f32[1,128], index: 2, kind: input, shape index: {}]
  %s3 = inlined_call_operand.hbm [shape: f32[16,128], index: 3, kind: output, shape index: {}]
  %s4 = sld [smem:[#allocation0]]
  $region30: #{tpu_custom_call.1} parent=0
    _
  %s6 = ssub.s32 1, %s4
  %s7 = scalar_select 0, %s6, %s4
  $region1: #{tpu_custom_call.1} parent=0
    #allocation2 [shape = 'u8[262144]{0}', space=vmem, size = 0x40000, scoped, tag = 'input window, operand 0, single buffered']
    #allocation3 [shape = 's32[1]{0}', space=sflag, size = 0x4, scoped, tag = 'scoped memory for tpu_custom_call.1']
    #allocation4 [shape = 's32[1]{0}', space=sflag, size = 0x4, scoped, tag = 'scoped memory for tpu_custom_call.1']
    #allocation5 [shape = 'u8[16384]{0}', space=vmem, size = 0x4000, scoped, tag = 'input window, operand 1, single buffered']
    #allocation6 [shape = 's32[1]{0}', space=sflag, size = 0x4, scoped, tag = 'scoped memory for tpu_custom_call.1']
    #allocation7 [shape = 'u8[8192]{0}', space=vmem, size = 0x2000, scoped, tag = 'output window, operand 0, single buffered']
    %8 = vsyncpa [#allocation3], 0
    %9 = vsyncpa [#allocation6], 0
    %10 = vsyncpa [#allocation4], 0
    // Predicated region
    $region2: #{tpu_custom_call.1} parent=1 // pred_check
      _
    $region3: #{tpu_custom_call.1} parent=1 // pred_check_branch
      %12 = sbr.rel (0) target = $region5
    $region4: #{tpu_custom_call.1} parent=1 // pred_region
      %14 = vsyncadd [#allocation3], 0
      %s15 = sshll.u32 %s0, 4
      %s16 = int_to_ptr.hbm [resolvable:$true] %s15
      %s17 = sshll.u32 [#allocation2], 4
      %s18 = int_to_ptr.vmem [resolvable:$true] %s17
      %23 = dma.hbm_to_vmem [thread:$0]  %s16, 8192, %s18, [#allocation3], 128, 128, 8
    $region5: #{tpu_custom_call.1} parent=1 // pred_fallthru
      _
    // Predicated region
    $region6: #{tpu_custom_call.1} parent=1 // pred_check
      _
    $region7: #{tpu_custom_call.1} parent=1 // pred_check_branch
      %25 = sbr.rel (0) target = $region9
    $region8: #{tpu_custom_call.1} parent=1 // pred_region
      %27 = vsyncadd [#allocation6], 0
      %s28 = sshll.u32 %s1, 4
      %s29 = int_to_ptr.hbm [resolvable:$true] %s28
      %s30 = sshll.u32 [#allocation5], 4
      %s31 = int_to_ptr.vmem [resolvable:$true] %s30
      %36 = dma.hbm_to_vmem [thread:$0]  %s29, 512, %s31, [#allocation6], 128, 128, 8
    $region9: #{tpu_custom_call.1} parent=1 // pred_fallthru
      _
    // Predicated region
    $region10: #{tpu_custom_call.1} parent=1 // pred_check
      _
    $region11: #{tpu_custom_call.1} parent=1 // pred_check_branch
      %38 = sbr.rel (0) target = $region13
    $region12: #{tpu_custom_call.1} parent=1 // pred_region
      _
    $region13: #{tpu_custom_call.1} parent=1 // pred_fallthru
      _
    // Predicated region
    $region14: #{tpu_custom_call.1} parent=1 // pred_check
      _
    $region15: #{tpu_custom_call.1} parent=1 // pred_check_branch
      %40 = sbr.rel (0) target = $region17
    $region16: #{tpu_custom_call.1} parent=1 // pred_region
      %42 = dma.done [#allocation3], 8192
    $region17: #{tpu_custom_call.1} parent=1 // pred_fallthru
      _
    // Predicated region
    $region18: #{tpu_custom_call.1} parent=1 // pred_check
      _
    $region19: #{tpu_custom_call.1} parent=1 // pred_check_branch
      %44 = sbr.rel (0) target = $region21
    $region20: #{tpu_custom_call.1} parent=1 // pred_region
      %46 = dma.done [#allocation6], 512
    $region21: #{tpu_custom_call.1} parent=1 // pred_fallthru
      _
    %v47 = vld [vmem:[#allocation2] sm:$0xff]
    %v48 = vld [vmem:[#allocation2 + $0x8] sm:$0xff]
    %v49 = vld [vmem:[#allocation2 + $0x10] sm:$0xff]
    %v50 = vld [vmem:[#allocation2 + $0x18] sm:$0xff]
    %v51 = vld [vmem:[#allocation2 + $0x20] sm:$0xff]
    %v52 = vld [vmem:[#allocation2 + $0x28] sm:$0xff]
    %v53 = vld [vmem:[#allocation2 + $0x30] sm:$0xff]
    %v54 = vld [vmem:[#allocation2 + $0x38] sm:$0xff]
    %v55 = vld [vmem:[#allocation2 + $0x40] sm:$0xff]
    %v56 = vld [vmem:[#allocation2 + $0x48] sm:$0xff]
    %v57 = vld [vmem:[#allocation2 + $0x50] sm:$0xff]
    %v58 = vld [vmem:[#allocation2 + $0x58] sm:$0xff]
    %v59 = vld [vmem:[#allocation2 + $0x60] sm:$0xff]
    %v60 = vld [vmem:[#allocation2 + $0x68] sm:$0xff]
    %v61 = vld [vmem:[#allocation2 + $0x70] sm:$0xff]
    %v62 = vld [vmem:[#allocation2 + $0x78] sm:$0xff]
    %v63 = vld [vmem:[#allocation2 + $0x80] sm:$0xff]
    %v64 = vld [vmem:[#allocation2 + $0x88] sm:$0xff]
    %v65 = vld [vmem:[#allocation2 + $0x90] sm:$0xff]
    %v66 = vld [vmem:[#allocation2 + $0x98] sm:$0xff]
    %v67 = vld [vmem:[#allocation2 + $0xa0] sm:$0xff]
    %v68 = vld [vmem:[#allocation2 + $0xa8] sm:$0xff]
    %v69 = vld [vmem:[#allocation2 + $0xb0] sm:$0xff]
    %v70 = vld [vmem:[#allocation2 + $0xb8] sm:$0xff]
    %v71 = vld [vmem:[#allocation2 + $0xc0] sm:$0xff]
    %v72 = vld [vmem:[#allocation2 + $0xc8] sm:$0xff]
    %v73 = vld [vmem:[#allocation2 + $0xd0] sm:$0xff]
    %v74 = vld [vmem:[#allocation2 + $0xd8] sm:$0xff]
    %v75 = vld [vmem:[#allocation2 + $0xe0] sm:$0xff]
    %v76 = vld [vmem:[#allocation2 + $0xe8] sm:$0xff]
    %v77 = vld [vmem:[#allocation2 + $0xf0] sm:$0xff]
    %v78 = vld [vmem:[#allocation2 + $0xf8] sm:$0xff]
    %v79 = vld [vmem:[#allocation2 + $0x100] sm:$0xff]
    %v80 = vld [vmem:[#allocation2 + $0x108] sm:$0xff]
    %v81 = vld [vmem:[#allocation2 + $0x110] sm:$0xff]
    %v82 = vld [vmem:[#allocation2 + $0x118] sm:$0xff]
    %v83 = vld [vmem:[#allocation2 + $0x120] sm:$0xff]
    %v84 = vld [vmem:[#allocation2 + $0x128] sm:$0xff]
    %v85 = vld [vmem:[#allocation2 + $0x130] sm:$0xff]
    %v86 = vld [vmem:[#allocation2 + $0x138] sm:$0xff]
    %v87 = vld [vmem:[#allocation2 + $0x140] sm:$0xff]
    %v88 = vld [vmem:[#allocation2 + $0x148] sm:$0xff]
    %v89 = vld [vmem:[#allocation2 + $0x150] sm:$0xff]
    %v90 = vld [vmem:[#allocation2 + $0x158] sm:$0xff]
    %v91 = vld [vmem:[#allocation2 + $0x160] sm:$0xff]
    %v92 = vld [vmem:[#allocation2 + $0x168] sm:$0xff]
    %v93 = vld [vmem:[#allocation2 + $0x170] sm:$0xff]
    %v94 = vld [vmem:[#allocation2 + $0x178] sm:$0xff]
    %v95 = vld [vmem:[#allocation2 + $0x180] sm:$0xff]
    %v96 = vld [vmem:[#allocation2 + $0x188] sm:$0xff]
    %v97 = vld [vmem:[#allocation2 + $0x190] sm:$0xff]
    %v98 = vld [vmem:[#allocation2 + $0x198] sm:$0xff]
    %v99 = vld [vmem:[#allocation2 + $0x1a0] sm:$0xff]
    %v100 = vld [vmem:[#allocation2 + $0x1a8] sm:$0xff]
    %v101 = vld [vmem:[#allocation2 + $0x1b0] sm:$0xff]
    %v102 = vld [vmem:[#allocation2 + $0x1b8] sm:$0xff]
    %v103 = vld [vmem:[#allocation2 + $0x1c0] sm:$0xff]
    %v104 = vld [vmem:[#allocation2 + $0x1c8] sm:$0xff]
    %v105 = vld [vmem:[#allocation2 + $0x1d0] sm:$0xff]
    %v106 = vld [vmem:[#allocation2 + $0x1d8] sm:$0xff]
    %v107 = vld [vmem:[#allocation2 + $0x1e0] sm:$0xff]
    %v108 = vld [vmem:[#allocation2 + $0x1e8] sm:$0xff]
    %v109 = vld [vmem:[#allocation2 + $0x1f0] sm:$0xff]
    %v110 = vld [vmem:[#allocation2 + $0x1f8] sm:$0xff]
    %vm111 = vcmask 400384
    %v112 = vsel %vm111, %v47, 0.0
    %113 = vadd.xlane.f32.xlu0 %v112
    %v114 = vpop.xlane.xlu0 %113
    %v115 = vsel %vm111, %v48, 0.0
    %116 = vadd.xlane.f32.xlu0 %v115
    %v117 = vpop.xlane.xlu0 %116
    %v118 = vsel %vm111, %v49, 0.0
    %119 = vadd.xlane.f32.xlu0 %v118
    %v120 = vpop.xlane.xlu0 %119
    %v121 = vsel %vm111, %v50, 0.0
    %122 = vadd.xlane.f32.xlu0 %v121
    %v123 = vpop.xlane.xlu0 %122
    %v124 = vsel %vm111, %v51, 0.0
    %125 = vadd.xlane.f32.xlu0 %v124
    %v126 = vpop.xlane.xlu0 %125
    %v127 = vsel %vm111, %v52, 0.0
    %128 = vadd.xlane.f32.xlu0 %v127
    %v129 = vpop.xlane.xlu0 %128
    %v130 = vsel %vm111, %v53, 0.0
    %131 = vadd.xlane.f32.xlu0 %v130
    %v132 = vpop.xlane.xlu0 %131
    %v133 = vsel %vm111, %v54, 0.0
    %134 = vadd.xlane.f32.xlu0 %v133
    %v135 = vpop.xlane.xlu0 %134
    %v136 = vsel %vm111, %v55, 0.0
    %137 = vadd.xlane.f32.xlu0 %v136
    %v138 = vpop.xlane.xlu0 %137
    %v139 = vsel %vm111, %v56, 0.0
    %140 = vadd.xlane.f32.xlu0 %v139
    %v141 = vpop.xlane.xlu0 %140
    %v142 = vsel %vm111, %v57, 0.0
    %143 = vadd.xlane.f32.xlu0 %v142
    %v144 = vpop.xlane.xlu0 %143
    %v145 = vsel %vm111, %v58, 0.0
    %146 = vadd.xlane.f32.xlu0 %v145
    %v147 = vpop.xlane.xlu0 %146
    %v148 = vsel %vm111, %v59, 0.0
    %149 = vadd.xlane.f32.xlu0 %v148
    %v150 = vpop.xlane.xlu0 %149
    %v151 = vsel %vm111, %v60, 0.0
    %152 = vadd.xlane.f32.xlu0 %v151
    %v153 = vpop.xlane.xlu0 %152
    %v154 = vsel %vm111, %v61, 0.0
    %155 = vadd.xlane.f32.xlu0 %v154
    %v156 = vpop.xlane.xlu0 %155
    %v157 = vsel %vm111, %v62, 0.0
    %158 = vadd.xlane.f32.xlu0 %v157
    %v159 = vpop.xlane.xlu0 %158
    %v160 = vsel %vm111, %v63, 0.0
    %161 = vadd.xlane.f32.xlu0 %v160
    %v162 = vpop.xlane.xlu0 %161
    %v163 = vsel %vm111, %v64, 0.0
    %164 = vadd.xlane.f32.xlu0 %v163
    %v165 = vpop.xlane.xlu0 %164
    %v166 = vsel %vm111, %v65, 0.0
    %167 = vadd.xlane.f32.xlu0 %v166
    %v168 = vpop.xlane.xlu0 %167
    %v169 = vsel %vm111, %v66, 0.0
    %170 = vadd.xlane.f32.xlu0 %v169
    %v171 = vpop.xlane.xlu0 %170
    %v172 = vsel %vm111, %v67, 0.0
    %173 = vadd.xlane.f32.xlu0 %v172
    %v174 = vpop.xlane.xlu0 %173
    %v175 = vsel %vm111, %v68, 0.0
    %176 = vadd.xlane.f32.xlu0 %v175
    %v177 = vpop.xlane.xlu0 %176
    %v178 = vsel %vm111, %v69, 0.0
    %179 = vadd.xlane.f32.xlu0 %v178
    %v180 = vpop.xlane.xlu0 %179
    %v181 = vsel %vm111, %v70, 0.0
    %182 = vadd.xlane.f32.xlu0 %v181
    %v183 = vpop.xlane.xlu0 %182
    %v184 = vsel %vm111, %v71, 0.0
    %185 = vadd.xlane.f32.xlu0 %v184
    %v186 = vpop.xlane.xlu0 %185
    %v187 = vsel %vm111, %v72, 0.0
    %188 = vadd.xlane.f32.xlu0 %v187
    %v189 = vpop.xlane.xlu0 %188
    %v190 = vsel %vm111, %v73, 0.0
    %191 = vadd.xlane.f32.xlu0 %v190
    %v192 = vpop.xlane.xlu0 %191
    %v193 = vsel %vm111, %v74, 0.0
    %194 = vadd.xlane.f32.xlu0 %v193
    %v195 = vpop.xlane.xlu0 %194
    %v196 = vsel %vm111, %v75, 0.0
    %197 = vadd.xlane.f32.xlu0 %v196
    %v198 = vpop.xlane.xlu0 %197
    %v199 = vsel %vm111, %v76, 0.0
    %200 = vadd.xlane.f32.xlu0 %v199
    %v201 = vpop.xlane.xlu0 %200
    %v202 = vsel %vm111, %v77, 0.0
    %203 = vadd.xlane.f32.xlu0 %v202
    %v204 = vpop.xlane.xlu0 %203
    %v205 = vsel %vm111, %v78, 0.0
    %206 = vadd.xlane.f32.xlu0 %v205
    %v207 = vpop.xlane.xlu0 %206
    %v208 = vsel %vm111, %v79, 0.0
    %209 = vadd.xlane.f32.xlu0 %v208
    %v210 = vpop.xlane.xlu0 %209
    %v211 = vsel %vm111, %v80, 0.0
    %212 = vadd.xlane.f32.xlu0 %v211
    %v213 = vpop.xlane.xlu0 %212
    %v214 = vsel %vm111, %v81, 0.0
    %215 = vadd.xlane.f32.xlu0 %v214
    %v216 = vpop.xlane.xlu0 %215
    %v217 = vsel %vm111, %v82, 0.0
    %218 = vadd.xlane.f32.xlu0 %v217
    %v219 = vpop.xlane.xlu0 %218
    %v220 = vsel %vm111, %v83, 0.0
    %221 = vadd.xlane.f32.xlu0 %v220
    %v222 = vpop.xlane.xlu0 %221
    %v223 = vsel %vm111, %v84, 0.0
    %224 = vadd.xlane.f32.xlu0 %v223
    %v225 = vpop.xlane.xlu0 %224
    %v226 = vsel %vm111, %v85, 0.0
    %227 = vadd.xlane.f32.xlu0 %v226
    %v228 = vpop.xlane.xlu0 %227
    %v229 = vsel %vm111, %v86, 0.0
    %230 = vadd.xlane.f32.xlu0 %v229
    %v231 = vpop.xlane.xlu0 %230
    %v232 = vsel %vm111, %v87, 0.0
    %233 = vadd.xlane.f32.xlu0 %v232
    %v234 = vpop.xlane.xlu0 %233
    %v235 = vsel %vm111, %v88, 0.0
    %236 = vadd.xlane.f32.xlu0 %v235
    %v237 = vpop.xlane.xlu0 %236
    %v238 = vsel %vm111, %v89, 0.0
    %239 = vadd.xlane.f32.xlu0 %v238
    %v240 = vpop.xlane.xlu0 %239
    %v241 = vsel %vm111, %v90, 0.0
    %242 = vadd.xlane.f32.xlu0 %v241
    %v243 = vpop.xlane.xlu0 %242
    %v244 = vsel %vm111, %v91, 0.0
    %245 = vadd.xlane.f32.xlu0 %v244
    %v246 = vpop.xlane.xlu0 %245
    %v247 = vsel %vm111, %v92, 0.0
    %248 = vadd.xlane.f32.xlu0 %v247
    %v249 = vpop.xlane.xlu0 %248
    %v250 = vsel %vm111, %v93, 0.0
    %251 = vadd.xlane.f32.xlu0 %v250
    %v252 = vpop.xlane.xlu0 %251
    %v253 = vsel %vm111, %v94, 0.0
    %254 = vadd.xlane.f32.xlu0 %v253
    %v255 = vpop.xlane.xlu0 %254
    %v256 = vsel %vm111, %v95, 0.0
    %257 = vadd.xlane.f32.xlu0 %v256
    %v258 = vpop.xlane.xlu0 %257
    %v259 = vsel %vm111, %v96, 0.0
    %260 = vadd.xlane.f32.xlu0 %v259
    %v261 = vpop.xlane.xlu0 %260
    %v262 = vsel %vm111, %v97, 0.0
    %263 = vadd.xlane.f32.xlu0 %v262
    %v264 = vpop.xlane.xlu0 %263
    %v265 = vsel %vm111, %v98, 0.0
    %266 = vadd.xlane.f32.xlu0 %v265
    %v267 = vpop.xlane.xlu0 %266
    %v268 = vsel %vm111, %v99, 0.0
    %269 = vadd.xlane.f32.xlu0 %v268
    %v270 = vpop.xlane.xlu0 %269
    %v271 = vsel %vm111, %v100, 0.0
    %272 = vadd.xlane.f32.xlu0 %v271
    %v273 = vpop.xlane.xlu0 %272
    %v274 = vsel %vm111, %v101, 0.0
    %275 = vadd.xlane.f32.xlu0 %v274
    %v276 = vpop.xlane.xlu0 %275
    %v277 = vsel %vm111, %v102, 0.0
    %278 = vadd.xlane.f32.xlu0 %v277
    %v279 = vpop.xlane.xlu0 %278
    %v280 = vsel %vm111, %v103, 0.0
    %281 = vadd.xlane.f32.xlu0 %v280
    %v282 = vpop.xlane.xlu0 %281
    %v283 = vsel %vm111, %v104, 0.0
    %284 = vadd.xlane.f32.xlu0 %v283
    %v285 = vpop.xlane.xlu0 %284
    %v286 = vsel %vm111, %v105, 0.0
    %287 = vadd.xlane.f32.xlu0 %v286
    %v288 = vpop.xlane.xlu0 %287
    %v289 = vsel %vm111, %v106, 0.0
    %290 = vadd.xlane.f32.xlu0 %v289
    %v291 = vpop.xlane.xlu0 %290
    %v292 = vsel %vm111, %v107, 0.0
    %293 = vadd.xlane.f32.xlu0 %v292
    %v294 = vpop.xlane.xlu0 %293
    %v295 = vsel %vm111, %v108, 0.0
    %296 = vadd.xlane.f32.xlu0 %v295
    %v297 = vpop.xlane.xlu0 %296
    %v298 = vsel %vm111, %v109, 0.0
    %299 = vadd.xlane.f32.xlu0 %v298
    %v300 = vpop.xlane.xlu0 %299
    %v301 = vsel %vm111, %v110, 0.0
    %302 = vadd.xlane.f32.xlu0 %v301
    %v303 = vpop.xlane.xlu0 %302
    %v304 = vrcp.pop 49.0
    %v305 = vmul.f32 49.0, %v304
    %v306 = vsub.f32 1.0, %v305
    %v307 = vmul.f32 %v304, %v306
    %v308 = vadd.f32 %v304, %v307
    %vm309 = vweird.f32 %v304
    %v310 = vsel %vm309, %v304, %v308
    %v311 = vmul.f32 %v114, %v310
    %v312 = vmul.f32 %v117, %v310
    %v313 = vmul.f32 %v120, %v310
    %v314 = vmul.f32 %v123, %v310
    %v315 = vmul.f32 %v126, %v310
    %v316 = vmul.f32 %v129, %v310
    %v317 = vmul.f32 %v132, %v310
    %v318 = vmul.f32 %v135, %v310
    %v319 = vmul.f32 %v138, %v310
    %v320 = vmul.f32 %v141, %v310
    %v321 = vmul.f32 %v144, %v310
    %v322 = vmul.f32 %v147, %v310
    %v323 = vmul.f32 %v150, %v310
    %v324 = vmul.f32 %v153, %v310
    %v325 = vmul.f32 %v156, %v310
    %v326 = vmul.f32 %v159, %v310
    %v327 = vmul.f32 %v162, %v310
    %v328 = vmul.f32 %v165, %v310
    %v329 = vmul.f32 %v168, %v310
    %v330 = vmul.f32 %v171, %v310
    %v331 = vmul.f32 %v174, %v310
    %v332 = vmul.f32 %v177, %v310
    %v333 = vmul.f32 %v180, %v310
    %v334 = vmul.f32 %v183, %v310
    %v335 = vmul.f32 %v186, %v310
    %v336 = vmul.f32 %v189, %v310
    %v337 = vmul.f32 %v192, %v310
    %v338 = vmul.f32 %v195, %v310
    %v339 = vmul.f32 %v198, %v310
    %v340 = vmul.f32 %v201, %v310
    %v341 = vmul.f32 %v204, %v310
    %v342 = vmul.f32 %v207, %v310
    %v343 = vmul.f32 %v210, %v310
    %v344 = vmul.f32 %v213, %v310
    %v345 = vmul.f32 %v216, %v310
    %v346 = vmul.f32 %v219, %v310
    %v347 = vmul.f32 %v222, %v310
    %v348 = vmul.f32 %v225, %v310
    %v349 = vmul.f32 %v228, %v310
    %v350 = vmul.f32 %v231, %v310
    %v351 = vmul.f32 %v234, %v310
    %v352 = vmul.f32 %v237, %v310
    %v353 = vmul.f32 %v240, %v310
    %v354 = vmul.f32 %v243, %v310
    %v355 = vmul.f32 %v246, %v310
    %v356 = vmul.f32 %v249, %v310
    %v357 = vmul.f32 %v252, %v310
    %v358 = vmul.f32 %v255, %v310
    %v359 = vmul.f32 %v258, %v310
    %v360 = vmul.f32 %v261, %v310
    %v361 = vmul.f32 %v264, %v310
    %v362 = vmul.f32 %v267, %v310
    %v363 = vmul.f32 %v270, %v310
    %v364 = vmul.f32 %v273, %v310
    %v365 = vmul.f32 %v276, %v310
    %v366 = vmul.f32 %v279, %v310
    %v367 = vmul.f32 %v282, %v310
    %v368 = vmul.f32 %v285, %v310
    %v369 = vmul.f32 %v288, %v310
    %v370 = vmul.f32 %v291, %v310
    %v371 = vmul.f32 %v294, %v310
    %v372 = vmul.f32 %v297, %v310
    %v373 = vmul.f32 %v300, %v310
    %v374 = vmul.f32 %v303, %v310
    %v375 = vld [vmem:[#allocation5] sm:$0xff]
    %v376 = vld [vmem:[#allocation5 + $0x8] sm:$0xff]
    %v377 = vld [vmem:[#allocation5 + $0x10] sm:$0xff]
    %v378 = vld [vmem:[#allocation5 + $0x18] sm:$0xff]
    %v379 = vld [vmem:[%s2] sm:$0x1]
    %v381 = vperm.slane %v379, 0
    %v447 = vlaneseq
    %v448 = vand.u32 %v447, 127
    %v449 = vperm.slane %v311, %v448
    %v450 = vadd.s32 %v448, 4294967288
    %v451 = vperm.slane %v312, %v450
    %vm452 = vcmask 130112
    %v453 = vsel %vm452, %v451, %v449
    %v454 = vadd.s32 %v448, 4294967280
    %v455 = vperm.slane %v313, %v454
    %vm456 = vcmask 195712
    %v457 = vsel %vm456, %v455, %v453
    %v458 = vadd.s32 %v448, 4294967272
    %v459 = vperm.slane %v314, %v458
    %vm460 = vcmask 261312
    %v461 = vsel %vm460, %v459, %v457
    %v462 = vperm.slane %v315, %v448
    %v463 = vperm.slane %v316, %v450
    %v464 = vsel %vm452, %v463, %v462
    %v465 = vperm.slane %v317, %v454
    %v466 = vsel %vm456, %v465, %v464
    %v467 = vperm.slane %v318, %v458
    %v468 = vsel %vm460, %v467, %v466
    %v469 = vperm.slane %v319, %v448
    %v470 = vperm.slane %v320, %v450
    %v471 = vsel %vm452, %v470, %v469
    %v472 = vperm.slane %v321, %v454
    %v473 = vsel %vm456, %v472, %v471
    %v474 = vperm.slane %v322, %v458
    %v475 = vsel %vm460, %v474, %v473
    %v476 = vperm.slane %v323, %v448
    %v477 = vperm.slane %v324, %v450
    %v478 = vsel %vm452, %v477, %v476
    %v479 = vperm.slane %v325, %v454
    %v480 = vsel %vm456, %v479, %v478
    %v481 = vperm.slane %v326, %v458
    %v482 = vsel %vm460, %v481, %v480
    %v483 = vperm.slane %v327, %v448
    %v484 = vperm.slane %v328, %v450
    %v485 = vsel %vm452, %v484, %v483
    %v486 = vperm.slane %v329, %v454
    %v487 = vsel %vm456, %v486, %v485
    %v488 = vperm.slane %v330, %v458
    %v489 = vsel %vm460, %v488, %v487
    %v490 = vperm.slane %v331, %v448
    %v491 = vperm.slane %v332, %v450
    %v492 = vsel %vm452, %v491, %v490
    %v493 = vperm.slane %v333, %v454
    %v494 = vsel %vm456, %v493, %v492
    %v495 = vperm.slane %v334, %v458
    %v496 = vsel %vm460, %v495, %v494
    %v497 = vperm.slane %v335, %v448
    %v498 = vperm.slane %v336, %v450
    %v499 = vsel %vm452, %v498, %v497
    %v500 = vperm.slane %v337, %v454
    %v501 = vsel %vm456, %v500, %v499
    %v502 = vperm.slane %v338, %v458
    %v503 = vsel %vm460, %v502, %v501
    %v504 = vperm.slane %v339, %v448
    %v505 = vperm.slane %v340, %v450
    %v506 = vsel %vm452, %v505, %v504
    %v507 = vperm.slane %v341, %v454
    %v508 = vsel %vm456, %v507, %v506
    %v509 = vperm.slane %v342, %v458
    %v510 = vsel %vm460, %v509, %v508
    %v511 = vperm.slane %v343, %v448
    %v512 = vperm.slane %v344, %v450
    %v513 = vsel %vm452, %v512, %v511
    %v514 = vperm.slane %v345, %v454
    %v515 = vsel %vm456, %v514, %v513
    %v516 = vperm.slane %v346, %v458
    %v517 = vsel %vm460, %v516, %v515
    %v518 = vperm.slane %v347, %v448
    %v519 = vperm.slane %v348, %v450
    %v520 = vsel %vm452, %v519, %v518
    %v521 = vperm.slane %v349, %v454
    %v522 = vsel %vm456, %v521, %v520
    %v523 = vperm.slane %v350, %v458
    %v524 = vsel %vm460, %v523, %v522
    %v525 = vperm.slane %v351, %v448
    %v526 = vperm.slane %v352, %v450
    %v527 = vsel %vm452, %v526, %v525
    %v528 = vperm.slane %v353, %v454
    %v529 = vsel %vm456, %v528, %v527
    %v530 = vperm.slane %v354, %v458
    %v531 = vsel %vm460, %v530, %v529
    %v532 = vperm.slane %v355, %v448
    %v533 = vperm.slane %v356, %v450
    %v534 = vsel %vm452, %v533, %v532
    %v535 = vperm.slane %v357, %v454
    %v536 = vsel %vm456, %v535, %v534
    %v537 = vperm.slane %v358, %v458
    %v538 = vsel %vm460, %v537, %v536
    %v539 = vperm.slane %v359, %v448
    %v540 = vperm.slane %v360, %v450
    %v541 = vsel %vm452, %v540, %v539
    %v542 = vperm.slane %v361, %v454
    %v543 = vsel %vm456, %v542, %v541
    %v544 = vperm.slane %v362, %v458
    %v545 = vsel %vm460, %v544, %v543
    %v546 = vperm.slane %v363, %v448
    %v547 = vperm.slane %v364, %v450
    %v548 = vsel %vm452, %v547, %v546
    %v549 = vperm.slane %v365, %v454
    %v550 = vsel %vm456, %v549, %v548
    %v551 = vperm.slane %v366, %v458
    %v552 = vsel %vm460, %v551, %v550
    %v553 = vperm.slane %v367, %v448
    %v554 = vperm.slane %v368, %v450
    %v555 = vsel %vm452, %v554, %v553
    %v556 = vperm.slane %v369, %v454
    %v557 = vsel %vm456, %v556, %v555
    %v558 = vperm.slane %v370, %v458
    %v559 = vsel %vm460, %v558, %v557
    %v560 = vperm.slane %v371, %v448
    %v561 = vperm.slane %v372, %v450
    %v562 = vsel %vm452, %v561, %v560
    %v563 = vperm.slane %v373, %v454
    %v564 = vsel %vm456, %v563, %v562
    %v565 = vperm.slane %v374, %v458
    %v566 = vsel %vm460, %v565, %v564
    %vm567 = vcmask 1041409
    %v568 = vsel %vm567, %v468, %v461
    %vm569 = vcmask 1042434
    %v570 = vsel %vm569, %v475, %v568
    %vm571 = vcmask 1043459
    %v572 = vsel %vm571, %v482, %v570
    %vm573 = vcmask 1044484
    %v574 = vsel %vm573, %v489, %v572
    %vm575 = vcmask 1045509
    %v576 = vsel %vm575, %v496, %v574
    %vm577 = vcmask 1046534
    %v578 = vsel %vm577, %v503, %v576
    %vm579 = vcmask 1047559
    %v580 = vsel %vm579, %v510, %v578
    %v581 = vsel %vm567, %v524, %v517
    %v582 = vsel %vm569, %v531, %v581
    %v583 = vsel %vm571, %v538, %v582
    %v584 = vsel %vm573, %v545, %v583
    %v585 = vsel %vm575, %v552, %v584
    %v586 = vsel %vm577, %v559, %v585
    %v587 = vsel %vm579, %v566, %v586
    %vm588 = vcmask 261120
    %v589 = vsel %vm588, %v580, 0
    %v591 = vsel %vm588, %v587, 0
    %593 = vmatpush.msra.mxu0 0.0
    %594 = vmatpush.msra.mxu0 0.0
    %595 = vmatpush.msra.mxu0 0.0
    %596 = vmatpush.msra.mxu0 0.0
    %597 = vmatpush.msra.mxu0 0.0
    %598 = vmatpush.msra.mxu0 0.0
    %599 = vmatpush.msra.mxu0 0.0
    %600 = vmatpush.msra.mxu0 0.0
    %601 = vmatpush.msra.mxu0 0.0
    %602 = vmatpush.msra.mxu0 0.0
    %603 = vmatpush.msra.mxu0 0.0
    %604 = vmatpush.msra.mxu0 0.0
    %605 = vmatpush.msra.mxu0 %v378
    %606 = vmatpush.msra.mxu0 %v377
    %607 = vmatpush.msra.mxu0 %v376
    %608 = vmatpush.msra.mxu0 %v375
    %609 = vmatmul.f32.gmra.mxu0 %v589
    %v610 = vpop.f32.mrf.mxu0
    %v611 = vadd.f32 %v381, %v610
    %612 = vmatmul.f32.gmra.mxu0 %v591
    %v613 = vpop.f32.mrf.mxu0
    %v614 = vadd.f32 %v381, %v613
    %615 = vdwg.mxu0
    %616 = vst [vmem:[#allocation7] sm:$0xff] %v611
    %617 = vst [vmem:[#allocation7 + $0x8] sm:$0xff] %v614
    // Predicated region
    $region22: #{tpu_custom_call.1} parent=1 // pred_check
      _
    $region23: #{tpu_custom_call.1} parent=1 // pred_check_branch
      %619 = sbr.rel (0) target = $region25
    $region24: #{tpu_custom_call.1} parent=1 // pred_region
      %621 = vsyncadd [#allocation4], 0
      %s622 = sshll.u32 [#allocation7], 4
      %s623 = int_to_ptr.vmem [resolvable:$true] %s622
      %s624 = sshll.u32 %s3, 4
      %s625 = int_to_ptr.hbm [resolvable:$true] %s624
      %630 = dma.vmem_to_hbm [thread:$0]  %s623, 256, %s625, [#allocation4], 128, 128, 8
    $region25: #{tpu_custom_call.1} parent=1 // pred_fallthru
      _
    // Predicated region
    $region26: #{tpu_custom_call.1} parent=1 // pred_check
      _
    $region27: #{tpu_custom_call.1} parent=1 // pred_check_branch
      %632 = sbr.rel (0) target = $region29
    $region28: #{tpu_custom_call.1} parent=1 // pred_region
      %634 = dma.done [#allocation4], 256
    $region29: #{tpu_custom_call.1} parent=1 // pred_fallthru
      _
    %635 = vsyncpa [#allocation3], 1
    %636 = vsyncpa [#allocation6], 1
    %637 = vsyncpa [#allocation4], 1

</llo_original>
